<compile_context>
chip_gen: v6e
topology: v6e:2x2x1
jax: 0.10.0
libtpu: 0.0.40
codegen_flags: <defaults>
</compile_context>

<pallas_src>
import jax
import jax.numpy as jnp
from jax.experimental import pallas as pl
from jax.experimental.pallas import tpu as pltpu

INPUT_DIM = 64
HIDDEN_DIM = 128
OUTPUT_DIM = 256


def _mlp_kernel(x_ref, w1_ref, b1_ref, w2_ref, b2_ref, w3_ref, b3_ref, o_ref):
    # Layer 1: Linear + ReLU   (Dropout = identity in eval mode)
    x_bf = x_ref[...].astype(jnp.bfloat16)          # cast in-kernel; K=64 dot, no pad
    h1 = jnp.dot(x_bf, w1_ref[...], preferred_element_type=jnp.float32)
    h1 = jnp.maximum(h1 + b1_ref[...], 0.0)

    # Layer 2: Linear + ReLU   (Dropout = identity in eval mode)
    h2 = jnp.dot(h1.astype(jnp.bfloat16), w2_ref[...],
                 preferred_element_type=jnp.float32)
    h2 = jnp.maximum(h2 + b2_ref[...], 0.0)

    # Layer 3: Linear + Sigmoid (sigmoid -> EUP slot)
    z = jnp.dot(h2.astype(jnp.bfloat16), w3_ref[...],
                preferred_element_type=jnp.float32)
    o_ref[...] = jax.nn.sigmoid(z + b3_ref[...]).astype(o_ref.dtype)


def _cdiv(a, b):
    return (a + b - 1) // b


def _round_up(n, m):
    return ((n + m - 1) // m) * m


def _choose_block_b(B, requested):
    """Pick a batch tile: minimal (x8) padding for small B; for larger B aim for a
    grid of >= 2 roughly-equal steps so both v7x TensorCores get work."""
    requested = max(8, _round_up(requested, 8))
    if B <= 128:
        return min(requested, _round_up(max(B, 8), 8))
    half = _round_up(_cdiv(B, 2), 128)
    return min(requested, half)


def prepare_params(params):
    """One-time prep: cast weights to bf16 (biases stay f32). Do this outside the
    per-call path so XLA doesn't re-cast ~256 KiB of weights on every call."""
    w1, b1, w2, b2, w3, b3 = params
    return (w1.astype(jnp.bfloat16), b1.astype(jnp.float32),
            w2.astype(jnp.bfloat16), b2.astype(jnp.float32),
            w3.astype(jnp.bfloat16), b3.astype(jnp.float32))


def neural_response_generator(x, params, *, block_b=512, out_dtype=jnp.float32):
    """Fused 3-layer MLP forward.

    x      : (B, INPUT_DIM) float32 (any B; sublane/block padded internally)
    params : params from init_params (weights pre-transposed (in, out)); pass
             prepare_params(params) to avoid per-call bf16 weight casts.
    """
    w1, b1, w2, b2, w3, b3 = params
    # No-op if already prepared; otherwise cast here (per-call cost).
    w1 = w1 if w1.dtype == jnp.bfloat16 else w1.astype(jnp.bfloat16)
    w2 = w2 if w2.dtype == jnp.bfloat16 else w2.astype(jnp.bfloat16)
    w3 = w3 if w3.dtype == jnp.bfloat16 else w3.astype(jnp.bfloat16)

    B = x.shape[0]
    blk = _choose_block_b(B, block_b)
    B_pad = _round_up(B, blk)
    if B_pad != B:
        # Padded rows produce sigmoid(bias)-valued garbage that is sliced off below.
        x = jnp.pad(x, ((0, B_pad - B), (0, 0)))
    grid = (B_pad // blk,)

    out_itemsize = jnp.dtype(out_dtype).itemsize
    weight_bytes = 2 * (INPUT_DIM * HIDDEN_DIM + HIDDEN_DIM * HIDDEN_DIM
                        + HIDDEN_DIM * OUTPUT_DIM) \
                 + 4 * (HIDDEN_DIM + HIDDEN_DIM + OUTPUT_DIM)
    flops_per_row = 2 * (INPUT_DIM * HIDDEN_DIM + HIDDEN_DIM * HIDDEN_DIM
                         + HIDDEN_DIM * OUTPUT_DIM)
    cost = pl.CostEstimate(
        flops=B_pad * flops_per_row,
        transcendentals=B_pad * OUTPUT_DIM,  # sigmoid exp per output element
        bytes_accessed=B_pad * INPUT_DIM * 4 + weight_bytes
                       + B_pad * OUTPUT_DIM * out_itemsize,
    )

    # Only needed if the tile is pushed past v5e's 16 MiB scoped-VMEM default.
    if blk > 2048:
        per_step = blk * INPUT_DIM * 4 + blk * OUTPUT_DIM * out_itemsize
        vmem_limit = 2 * per_step + 2 * weight_bytes + (2 << 20)
        compiler_params = pltpu.CompilerParams(
            dimension_semantics=("parallel",), vmem_limit_bytes=vmem_limit)
    else:
        compiler_params = pltpu.CompilerParams(
            dimension_semantics=("parallel",))

    full = lambda shape: pl.BlockSpec(shape, lambda i: (0, 0))

    out = pl.pallas_call(
        _mlp_kernel,
        out_shape=jax.ShapeDtypeStruct((B_pad, OUTPUT_DIM), out_dtype),
        grid_spec=pltpu.PrefetchScalarGridSpec(
            num_scalar_prefetch=0,
            grid=grid,
            in_specs=[
                pl.BlockSpec((blk, INPUT_DIM), lambda i: (i, 0)),  # x tile (f32)
                full((INPUT_DIM, HIDDEN_DIM)),     # w1 (bf16)
                full((1, HIDDEN_DIM)),             # b1 (f32)
                full((HIDDEN_DIM, HIDDEN_DIM)),    # w2 (bf16)
                full((1, HIDDEN_DIM)),             # b2 (f32)
                full((HIDDEN_DIM, OUTPUT_DIM)),    # w3 (bf16)
                full((1, OUTPUT_DIM)),             # b3 (f32)
            ],
            out_specs=pl.BlockSpec((blk, OUTPUT_DIM), lambda i: (i, 0)),
        ),
        compiler_params=compiler_params,
        cost_estimate=cost,
    )(x, w1, b1, w2, b2, w3, b3)

    return out[:B] if B_pad != B else out


def init_params(key):
    """Deterministic init mimicking PyTorch nn.Linear default (uniform +/-1/sqrt(fan_in)).
    Weights are stored transposed: (in_features, out_features). All f32."""
    ks = jax.random.split(key, 6)

    def linear(kw, kb, fan_in, fan_out):
        bound = 1.0 / jnp.sqrt(float(fan_in))
        w = jax.random.uniform(kw, (fan_in, fan_out), jnp.float32, -bound, bound)
        b = jax.random.uniform(kb, (1, fan_out), jnp.float32, -bound, bound)
        return w, b

    w1, b1 = linear(ks[0], ks[1], INPUT_DIM, HIDDEN_DIM)
    w2, b2 = linear(ks[2], ks[3], HIDDEN_DIM, HIDDEN_DIM)
    w3, b3 = linear(ks[4], ks[5], HIDDEN_DIM, OUTPUT_DIM)
    return (w1, b1, w2, b2, w3, b3)


def _reference(x, params):
    w1, b1, w2, b2, w3, b3 = params
    h = jnp.maximum(x @ w1 + b1, 0.0)
    h = jnp.maximum(h @ w2 + b2, 0.0)
    return jax.nn.sigmoid(h @ w3 + b3)


if __name__ == "__main__":
    key = jax.random.PRNGKey(0)
    k_x, k_p = jax.random.split(key)
    params = init_params(k_p)
    bf16_params = prepare_params(params)   # one-time weight cast, cached

    # Small deterministic case: B=4 -> single (8, 64) tile, minimal padding.
    B = 4
    x = jax.random.normal(k_x, (B, INPUT_DIM), dtype=jnp.float32)
    out = jax.block_until_ready(neural_response_generator(x, bf16_params))
    ref = jax.block_until_ready(_reference(x, params))
    assert out.shape == (B, OUTPUT_DIM), out.shape
    # bf16 matmul operands with f32 accumulation -> relaxed tolerance.
    err = float(jnp.max(jnp.abs(out - ref)))
    assert err < 2e-2, err

    # Ragged / multi-tile case: B=260 -> block=256, grid=(2,) (both v7x TCs),
    # exercises the batch-padding + slice-back path.
    B2 = 260
    x2 = jax.random.normal(jax.random.PRNGKey(3), (B2, INPUT_DIM), dtype=jnp.float32)
    out2 = jax.block_until_ready(
        neural_response_generator(x2, bf16_params, block_b=512))
    ref2 = jax.block_until_ready(_reference(x2, params))
    assert out2.shape == (B2, OUTPUT_DIM), out2.shape
    err2 = float(jnp.max(jnp.abs(out2 - ref2)))
    assert err2 < 2e-2, err2

    print("KERNEL_OK")
</pallas_src>

<mosaic_0001>
module attributes {stable_mosaic.version = 11 : i64} {
  func.func @_mlp_kernel(%arg0: i32, %arg1: memref<8x64xf32, #tpu.memory_space<vmem>>, %arg2: memref<64x128xbf16, #tpu.memory_space<vmem>>, %arg3: memref<1x128xf32, #tpu.memory_space<vmem>>, %arg4: memref<128x128xbf16, #tpu.memory_space<vmem>>, %arg5: memref<1x128xf32, #tpu.memory_space<vmem>>, %arg6: memref<128x256xbf16, #tpu.memory_space<vmem>>, %arg7: memref<1x256xf32, #tpu.memory_space<vmem>>, %arg8: memref<8x256xf32, #tpu.memory_space<vmem>>) attributes {dimension_semantics = [#tpu.dimension_semantics<parallel>], iteration_bounds = array<i64: 1>, scalar_prefetch = 0 : i64, scratch_operands = 0 : i64, tpu.core_type = #tpu.core_type<tc>, window_params = [{transform_indices = @transform_0, window_bounds = array<i64: 8, 64>}, {pipeline_mode = #tpu.pipeline_mode<synchronous>, transform_indices = @transform_1, window_bounds = array<i64: 64, 128>}, {pipeline_mode = #tpu.pipeline_mode<synchronous>, transform_indices = @transform_2, window_bounds = array<i64: 1, 128>}, {pipeline_mode = #tpu.pipeline_mode<synchronous>, transform_indices = @transform_3, window_bounds = array<i64: 128, 128>}, {pipeline_mode = #tpu.pipeline_mode<synchronous>, transform_indices = @transform_4, window_bounds = array<i64: 1, 128>}, {pipeline_mode = #tpu.pipeline_mode<synchronous>, transform_indices = @transform_5, window_bounds = array<i64: 128, 256>}, {pipeline_mode = #tpu.pipeline_mode<synchronous>, transform_indices = @transform_6, window_bounds = array<i64: 1, 256>}, {transform_indices = @transform_7, window_bounds = array<i64: 8, 256>}]} {
    %c0 = arith.constant 0 : index
    %c0_0 = arith.constant 0 : index
    %0 = vector.load %arg1[%c0, %c0_0] : memref<8x64xf32, #tpu.memory_space<vmem>>, vector<8x64xf32>
    %1 = arith.truncf %0 : vector<8x64xf32> to vector<8x64xbf16>
    %c0_1 = arith.constant 0 : index
    %c0_2 = arith.constant 0 : index
    %2 = vector.load %arg2[%c0_1, %c0_2] : memref<64x128xbf16, #tpu.memory_space<vmem>>, vector<64x128xbf16>
    %cst = arith.constant dense<0.000000e+00> : vector<8x128xf32>
    %3 = tpu.matmul %1, %2, %cst {dimension_numbers = #tpu.dot_dimension_numbers<[1], [0], [0], [1], [0, 0, 1, 1], [], []>} : vector<8x64xbf16>, vector<64x128xbf16>, vector<8x128xf32> -> vector<8x128xf32>
    %c0_3 = arith.constant 0 : index
    %c0_4 = arith.constant 0 : index
    %4 = vector.load %arg3[%c0_3, %c0_4] : memref<1x128xf32, #tpu.memory_space<vmem>>, vector<1x128xf32>
    %5 = vector.broadcast %4 : vector<1x128xf32> to vector<8x128xf32>
    %6 = arith.addf %3, %5 : vector<8x128xf32>
    %cst_5 = arith.constant 0.000000e+00 : f32
    %7 = vector.broadcast %cst_5 : f32 to vector<8x128xf32>
    %8 = arith.maximumf %6, %7 : vector<8x128xf32>
    %9 = arith.truncf %8 : vector<8x128xf32> to vector<8x128xbf16>
    %c0_6 = arith.constant 0 : index
    %c0_7 = arith.constant 0 : index
    %10 = vector.load %arg4[%c0_6, %c0_7] : memref<128x128xbf16, #tpu.memory_space<vmem>>, vector<128x128xbf16>
    %cst_8 = arith.constant dense<0.000000e+00> : vector<8x128xf32>
    %11 = tpu.matmul %9, %10, %cst_8 {dimension_numbers = #tpu.dot_dimension_numbers<[1], [0], [0], [1], [0, 0, 1, 1], [], []>} : vector<8x128xbf16>, vector<128x128xbf16>, vector<8x128xf32> -> vector<8x128xf32>
    %c0_9 = arith.constant 0 : index
    %c0_10 = arith.constant 0 : index
    %12 = vector.load %arg5[%c0_9, %c0_10] : memref<1x128xf32, #tpu.memory_space<vmem>>, vector<1x128xf32>
    %13 = vector.broadcast %12 : vector<1x128xf32> to vector<8x128xf32>
    %14 = arith.addf %11, %13 : vector<8x128xf32>
    %cst_11 = arith.constant 0.000000e+00 : f32
    %15 = vector.broadcast %cst_11 : f32 to vector<8x128xf32>
    %16 = arith.maximumf %14, %15 : vector<8x128xf32>
    %17 = arith.truncf %16 : vector<8x128xf32> to vector<8x128xbf16>
    %c0_12 = arith.constant 0 : index
    %c0_13 = arith.constant 0 : index
    %18 = vector.load %arg6[%c0_12, %c0_13] : memref<128x256xbf16, #tpu.memory_space<vmem>>, vector<128x256xbf16>
    %cst_14 = arith.constant dense<0.000000e+00> : vector<8x256xf32>
    %19 = tpu.matmul %17, %18, %cst_14 {dimension_numbers = #tpu.dot_dimension_numbers<[1], [0], [0], [1], [0, 0, 1, 1], [], []>} : vector<8x128xbf16>, vector<128x256xbf16>, vector<8x256xf32> -> vector<8x256xf32>
    %c0_15 = arith.constant 0 : index
    %c0_16 = arith.constant 0 : index
    %20 = vector.load %arg7[%c0_15, %c0_16] : memref<1x256xf32, #tpu.memory_space<vmem>>, vector<1x256xf32>
    %21 = vector.broadcast %20 : vector<1x256xf32> to vector<8x256xf32>
    %22 = arith.addf %19, %21 : vector<8x256xf32>
    %23 = arith.negf %22 : vector<8x256xf32>
    %24 = math.exp %23 : vector<8x256xf32>
    %cst_17 = arith.constant 1.000000e+00 : f32
    %25 = vector.broadcast %cst_17 : f32 to vector<8x256xf32>
    %26 = arith.addf %25, %24 : vector<8x256xf32>
    %27 = arith.divf %25, %26 : vector<8x256xf32>
    %c0_18 = arith.constant 0 : index
    %c0_19 = arith.constant 0 : index
    %28 = vector.load %arg8[%c0_18, %c0_19] : memref<8x256xf32, #tpu.memory_space<vmem>>, vector<8x256xf32>
    tpu.vector_store %arg8[%c0_18, %c0_19], %27 {strides = array<i32>} : memref<8x256xf32, #tpu.memory_space<vmem>>, vector<8x256xf32>,
    return
  }
  func.func @transform_0(%arg0: i32) -> (i32, i32) {
    %c0_i32 = arith.constant 0 : i32
    %c0_i32_0 = arith.constant 0 : i32
    return %arg0, %c0_i32 : i32, i32
  }
  func.func @transform_1(%arg0: i32) -> (i32, i32) {
    %c0_i32 = arith.constant 0 : i32
    %c0_i32_0 = arith.constant 0 : i32
    %c0_i32_1 = arith.constant 0 : i32
    return %c0_i32, %c0_i32_0 : i32, i32
  }
  func.func @transform_2(%arg0: i32) -> (i32, i32) {
    %c0_i32 = arith.constant 0 : i32
    %c0_i32_0 = arith.constant 0 : i32
    %c0_i32_1 = arith.constant 0 : i32
    return %c0_i32, %c0_i32_0 : i32, i32
  }
  func.func @transform_3(%arg0: i32) -> (i32, i32) {
    %c0_i32 = arith.constant 0 : i32
    %c0_i32_0 = arith.constant 0 : i32
    %c0_i32_1 = arith.constant 0 : i32
    return %c0_i32, %c0_i32_0 : i32, i32
  }
  func.func @transform_4(%arg0: i32) -> (i32, i32) {
    %c0_i32 = arith.constant 0 : i32
    %c0_i32_0 = arith.constant 0 : i32
    %c0_i32_1 = arith.constant 0 : i32
    return %c0_i32, %c0_i32_0 : i32, i32
  }
  func.func @transform_5(%arg0: i32) -> (i32, i32) {
    %c0_i32 = arith.constant 0 : i32
    %c0_i32_0 = arith.constant 0 : i32
    %c0_i32_1 = arith.constant 0 : i32
    return %c0_i32, %c0_i32_0 : i32, i32
  }
  func.func @transform_6(%arg0: i32) -> (i32, i32) {
    %c0_i32 = arith.constant 0 : i32
    %c0_i32_0 = arith.constant 0 : i32
    %c0_i32_1 = arith.constant 0 : i32
    return %c0_i32, %c0_i32_0 : i32, i32
  }
  func.func @transform_7(%arg0: i32) -> (i32, i32) {
    %c0_i32 = arith.constant 0 : i32
    %c0_i32_0 = arith.constant 0 : i32
    return %arg0, %c0_i32 : i32, i32
  }
}

</mosaic_0001>

<llo_original>
// kernel: tpu_custom_call.1
$region0: #{tpu_custom_call.1}
  #allocation0 [shape = 'u32[]', space=smem, size = 0x4, offset = 0x4, fixed_abs, tag = 'smem constant byte address 0x4 - core index']
  #allocation1 [shape = 'u32[144,128]{1,0:T(1,128)}', space=vmem, size = 0x12000, scoped, tag = 'internal scratch']
  %s0 = inlined_call_operand.hbm [shape: f32[8,64], index: 0, kind: input, shape index: {}]
  %s1 = inlined_call_operand.hbm [shape: bf16[64,128], index: 1, kind: input, shape index: {}]
  %s2 = inlined_call_operand.vmem [shape: f32[1,128], index: 2, kind: input, shape index: {}]
  %s3 = inlined_call_operand.hbm [shape: bf16[128,128], index: 3, kind: input, shape index: {}]
  %s4 = inlined_call_operand.vmem [shape: f32[1,128], index: 4, kind: input, shape index: {}]
  %s5 = inlined_call_operand.hbm [shape: bf16[128,256], index: 5, kind: input, shape index: {}]
  %s6 = inlined_call_operand.vmem [shape: f32[1,256], index: 6, kind: input, shape index: {}]
  %s7 = inlined_call_operand.hbm [shape: f32[8,256], index: 7, kind: output, shape index: {}]
  %s8 = sld [smem:[#allocation0]]
  $region54: #{tpu_custom_call.1} parent=0
    _
  %s10 = ssub.s32 1, %s8
  %s11 = scalar_select 0, %s10, %s8
  $region1: #{tpu_custom_call.1} parent=0
    #allocation2 [shape = 'u8[4096]{0}', space=vmem, size = 0x1000, scoped, tag = 'input window, operand 0, single buffered']
    #allocation3 [shape = 's32[1]{0}', space=sflag, size = 0x4, scoped, tag = 'scoped memory for tpu_custom_call.1']
    #allocation4 [shape = 's32[1]{0}', space=sflag, size = 0x4, scoped, tag = 'scoped memory for tpu_custom_call.1']
    #allocation5 [shape = 'u8[16384]{0}', space=vmem, size = 0x4000, scoped, tag = 'input window, operand 1, single buffered']
    #allocation6 [shape = 's32[1]{0}', space=sflag, size = 0x4, scoped, tag = 'scoped memory for tpu_custom_call.1']
    #allocation7 [shape = 'u8[32768]{0}', space=vmem, size = 0x8000, scoped, tag = 'input window, operand 3, single buffered']
    #allocation8 [shape = 'u8[65536]{0}', space=vmem, size = 0x10000, scoped, tag = 'input window, operand 5, single buffered']
    #allocation9 [shape = 's32[1]{0}', space=sflag, size = 0x4, scoped, tag = 'scoped memory for tpu_custom_call.1']
    #allocation10 [shape = 'u8[8192]{0}', space=vmem, size = 0x2000, scoped, tag = 'output window, operand 0, single buffered']
    %12 = vsyncpa [#allocation3], 0
    %13 = vsyncpa [#allocation6], 0
    %14 = vsyncpa [#allocation9], 0
    %15 = vsyncpa [#allocation4], 0
    // Predicated region
    $region2: #{tpu_custom_call.1} parent=1 // pred_check
      _
    $region3: #{tpu_custom_call.1} parent=1 // pred_check_branch
      %17 = sbr.rel (0) target = $region5
    $region4: #{tpu_custom_call.1} parent=1 // pred_region
      %s19 = ssub.s32 128, 128
      %20 = vsyncadd [#allocation3], %s19
      %s22 = sshll.u32 [#allocation2], 4
      %s23 = int_to_ptr.vmem [resolvable:$true] %s22
      %25 = dma.hbm_to_vmem [thread:$0]  %s0, 128, %s23, [#allocation3]
    $region5: #{tpu_custom_call.1} parent=1 // pred_fallthru
      _
    // Predicated region
    $region6: #{tpu_custom_call.1} parent=1 // pred_check
      _
    $region7: #{tpu_custom_call.1} parent=1 // pred_check_branch
      %27 = sbr.rel (0) target = $region9
    $region8: #{tpu_custom_call.1} parent=1 // pred_region
      %s29 = ssub.s32 512, 512
      %30 = vsyncadd [#allocation6], %s29
      %s31 = sshll.u32 [#allocation5], 4
      %s32 = int_to_ptr.vmem [resolvable:$true] %s31
      %37 = dma.hbm_to_vmem [thread:$0]  %s1, 512, %s32, [#allocation6], 64, 64, 4
    $region9: #{tpu_custom_call.1} parent=1 // pred_fallthru
      _
    // Predicated region
    $region10: #{tpu_custom_call.1} parent=1 // pred_check
      _
    $region11: #{tpu_custom_call.1} parent=1 // pred_check_branch
      %39 = sbr.rel (0) target = $region13
    $region12: #{tpu_custom_call.1} parent=1 // pred_region
      _
    $region13: #{tpu_custom_call.1} parent=1 // pred_fallthru
      _
    // Predicated region
    $region14: #{tpu_custom_call.1} parent=1 // pred_check
      _
    $region15: #{tpu_custom_call.1} parent=1 // pred_check_branch
      %41 = sbr.rel (0) target = $region17
    $region16: #{tpu_custom_call.1} parent=1 // pred_region
      %s43 = ssub.s32 1024, 1024
      %44 = vsyncadd [#allocation6], %s43
      %s45 = sshll.u32 [#allocation7], 4
      %s46 = int_to_ptr.vmem [resolvable:$true] %s45
      %51 = dma.hbm_to_vmem [thread:$0]  %s3, 1024, %s46, [#allocation6], 64, 64, 4
    $region17: #{tpu_custom_call.1} parent=1 // pred_fallthru
      _
    // Predicated region
    $region18: #{tpu_custom_call.1} parent=1 // pred_check
      _
    $region19: #{tpu_custom_call.1} parent=1 // pred_check_branch
      %53 = sbr.rel (0) target = $region21
    $region20: #{tpu_custom_call.1} parent=1 // pred_region
      _
    $region21: #{tpu_custom_call.1} parent=1 // pred_fallthru
      _
    // Predicated region
    $region22: #{tpu_custom_call.1} parent=1 // pred_check
      _
    $region23: #{tpu_custom_call.1} parent=1 // pred_check_branch
      %55 = sbr.rel (0) target = $region25
    $region24: #{tpu_custom_call.1} parent=1 // pred_region
      %s57 = ssub.s32 2048, 2048
      %58 = vsyncadd [#allocation9], %s57
      %s59 = sshll.u32 [#allocation8], 4
      %s60 = int_to_ptr.vmem [resolvable:$true] %s59
      %65 = dma.hbm_to_vmem [thread:$0]  %s5, 2048, %s60, [#allocation9], 128, 128, 8
    $region25: #{tpu_custom_call.1} parent=1 // pred_fallthru
      _
    // Predicated region
    $region26: #{tpu_custom_call.1} parent=1 // pred_check
      _
    $region27: #{tpu_custom_call.1} parent=1 // pred_check_branch
      %67 = sbr.rel (0) target = $region29
    $region28: #{tpu_custom_call.1} parent=1 // pred_region
      _
    $region29: #{tpu_custom_call.1} parent=1 // pred_fallthru
      _
    // Predicated region
    $region30: #{tpu_custom_call.1} parent=1 // pred_check
      _
    $region31: #{tpu_custom_call.1} parent=1 // pred_check_branch
      %69 = sbr.rel (0) target = $region33
    $region32: #{tpu_custom_call.1} parent=1 // pred_region
      %70 = dma.done [#allocation3], 128
    $region33: #{tpu_custom_call.1} parent=1 // pred_fallthru
      _
    // Predicated region
    $region34: #{tpu_custom_call.1} parent=1 // pred_check
      _
    $region35: #{tpu_custom_call.1} parent=1 // pred_check_branch
      %72 = sbr.rel (0) target = $region37
    $region36: #{tpu_custom_call.1} parent=1 // pred_region
      %73 = dma.done [#allocation6], 512
    $region37: #{tpu_custom_call.1} parent=1 // pred_fallthru
      _
    // Predicated region
    $region38: #{tpu_custom_call.1} parent=1 // pred_check
      _
    $region39: #{tpu_custom_call.1} parent=1 // pred_check_branch
      %75 = sbr.rel (0) target = $region41
    $region40: #{tpu_custom_call.1} parent=1 // pred_region
      %76 = dma.done [#allocation6], 1024
    $region41: #{tpu_custom_call.1} parent=1 // pred_fallthru
      _
    // Predicated region
    $region42: #{tpu_custom_call.1} parent=1 // pred_check
      _
    $region43: #{tpu_custom_call.1} parent=1 // pred_check_branch
      %78 = sbr.rel (0) target = $region45
    $region44: #{tpu_custom_call.1} parent=1 // pred_region
      %79 = dma.done [#allocation9], 2048
    $region45: #{tpu_custom_call.1} parent=1 // pred_fallthru
      _
    %v81 = vld [vmem:[#allocation2] sm:$0xff]
    %v82 = vpack.c.bf16 %v81, %v81
    %v83 = vld [vmem:[#allocation5] sm:$0xf]
    %v84 = vld [vmem:[#allocation5 + $0x4] sm:$0xf]
    %v85 = vld [vmem:[#allocation5 + $0x8] sm:$0xf]
    %v86 = vld [vmem:[#allocation5 + $0xc] sm:$0xf]
    %v87 = vld [vmem:[#allocation5 + $0x10] sm:$0xf]
    %v88 = vld [vmem:[#allocation5 + $0x14] sm:$0xf]
    %v89 = vld [vmem:[#allocation5 + $0x18] sm:$0xf]
    %v90 = vld [vmem:[#allocation5 + $0x1c] sm:$0xf]
    %v91 = vld [vmem:[%s2] sm:$0x1]
    %v93 = vlaneseq
    %v94 = vshrl.u32 %v93, 7
    %v95 = vsub.s32 0, %v94
    %v96 = vrot.slane %v91, %v95
    %v106 = vunpack.c.l.b16 %v83
    %v107 = vunpack.c.l.b16 %v84
    %v108 = vunpack.c.l.b16 %v85
    %v109 = vunpack.c.l.b16 %v86
    %v110 = vunpack.c.l.b16 %v87
    %v111 = vunpack.c.l.b16 %v88
    %v112 = vunpack.c.l.b16 %v89
    %v113 = vunpack.c.l.b16 %v90
    %v114 = vpack.c.b16 %v107, %v106
    %v115 = vpack.c.b16 %v109, %v108
    %v116 = vpack.c.b16 %v111, %v110
    %v117 = vpack.c.b16 %v113, %v112
    %vm122 = vcmask 523264
    %v124 = vsel %vm122, %v82, 0
    %126 = vmatprep.subr.bf16.mxu0 0
    %127 = vmatpush1.bf16.msra.mxu0 0
    %128 = vmatprep.subr.bf16.mxu0 0
    %129 = vmatpush1.bf16.msra.mxu0 0
    %130 = vmatprep.subr.bf16.mxu0 0
    %131 = vmatpush1.bf16.msra.mxu0 0
    %132 = vmatprep.subr.bf16.mxu0 0
    %133 = vmatpush1.bf16.msra.mxu0 0
    %134 = vmatprep.subr.bf16.mxu0 0
    %135 = vmatpush1.bf16.msra.mxu0 %v117
    %136 = vmatprep.subr.bf16.mxu0 0
    %137 = vmatpush1.bf16.msra.mxu0 %v116
    %138 = vmatprep.subr.bf16.mxu0 0
    %139 = vmatpush1.bf16.msra.mxu0 %v115
    %140 = vmatprep.subr.bf16.mxu0 0
    %141 = vmatpush1.bf16.msra.mxu0 %v114
    %142 = vmatprep.subr.bf16.mxu0 0
    %143 = vmatpush2.bf16.msra.mxu0 0
    %144 = vmatprep.subr.bf16.mxu0 0
    %145 = vmatpush2.bf16.msra.mxu0 0
    %146 = vmatprep.subr.bf16.mxu0 0
    %147 = vmatpush2.bf16.msra.mxu0 0
    %148 = vmatprep.subr.bf16.mxu0 0
    %149 = vmatpush2.bf16.msra.mxu0 0
    %150 = vmatprep.subr.bf16.mxu0 0
    %151 = vmatpush2.bf16.msra.mxu0 0
    %152 = vmatprep.subr.bf16.mxu0 0
    %153 = vmatpush2.bf16.msra.mxu0 0
    %154 = vmatprep.subr.bf16.mxu0 0
    %155 = vmatpush2.bf16.msra.mxu0 0
    %156 = vmatprep.subr.bf16.mxu0 0
    %157 = vmatpush2.bf16.msra.mxu0 0
    %158 = vmatprep.mubr.bf16.mxu0 0
    %159 = vmatmul.mubr.bf16.gmra.mxu0 %v124
    %v160 = vpop.f32.mrf.mxu0
    %v161 = vadd.f32 %v96, %v160
    %v162 = vpop.f32.mrf.mxu0
    %v163 = vpop.f32.mrf.mxu0
    %v164 = vpop.f32.mrf.mxu0
    %165 = vdwg.mxu0
    %v166 = vmax.f32 %v161, 0.0
    %v167 = vpack.c.bf16 %v166, %v166
    %v168 = vld [vmem:[#allocation7] sm:$0xf]
    %v169 = vld [vmem:[#allocation7 + $0x4] sm:$0xf]
    %v170 = vld [vmem:[#allocation7 + $0x8] sm:$0xf]
    %v171 = vld [vmem:[#allocation7 + $0xc] sm:$0xf]
    %v172 = vld [vmem:[#allocation7 + $0x10] sm:$0xf]
    %v173 = vld [vmem:[#allocation7 + $0x14] sm:$0xf]
    %v174 = vld [vmem:[#allocation7 + $0x18] sm:$0xf]
    %v175 = vld [vmem:[#allocation7 + $0x1c] sm:$0xf]
    %v176 = vld [vmem:[#allocation7 + $0x20] sm:$0xf]
    %v177 = vld [vmem:[#allocation7 + $0x24] sm:$0xf]
    %v178 = vld [vmem:[#allocation7 + $0x28] sm:$0xf]
    %v179 = vld [vmem:[#allocation7 + $0x2c] sm:$0xf]
    %v180 = vld [vmem:[#allocation7 + $0x30] sm:$0xf]
    %v181 = vld [vmem:[#allocation7 + $0x34] sm:$0xf]
    %v182 = vld [vmem:[#allocation7 + $0x38] sm:$0xf]
    %v183 = vld [vmem:[#allocation7 + $0x3c] sm:$0xf]
    %v184 = vld [vmem:[%s4] sm:$0x1]
    %v186 = vlaneseq
    %v187 = vshrl.u32 %v186, 7
    %v188 = vsub.s32 0, %v187
    %v189 = vrot.slane %v184, %v188
    %v207 = vunpack.c.l.b16 %v168
    %v208 = vunpack.c.l.b16 %v169
    %v209 = vunpack.c.l.b16 %v170
    %v210 = vunpack.c.l.b16 %v171
    %v211 = vunpack.c.l.b16 %v172
    %v212 = vunpack.c.l.b16 %v173
    %v213 = vunpack.c.l.b16 %v174
    %v214 = vunpack.c.l.b16 %v175
    %v215 = vunpack.c.l.b16 %v176
    %v216 = vunpack.c.l.b16 %v177
    %v217 = vunpack.c.l.b16 %v178
    %v218 = vunpack.c.l.b16 %v179
    %v219 = vunpack.c.l.b16 %v180
    %v220 = vunpack.c.l.b16 %v181
    %v221 = vunpack.c.l.b16 %v182
    %v222 = vunpack.c.l.b16 %v183
    %v223 = vpack.c.b16 %v208, %v207
    %v224 = vpack.c.b16 %v210, %v209
    %v225 = vpack.c.b16 %v212, %v211
    %v226 = vpack.c.b16 %v214, %v213
    %v227 = vpack.c.b16 %v216, %v215
    %v228 = vpack.c.b16 %v218, %v217
    %v229 = vpack.c.b16 %v220, %v219
    %v230 = vpack.c.b16 %v222, %v221
    %239 = vmatprep.subr.bf16.mxu0 0
    %240 = vmatpush1.bf16.msra.mxu0 %v230
    %241 = vmatprep.subr.bf16.mxu0 0
    %242 = vmatpush1.bf16.msra.mxu0 %v229
    %243 = vmatprep.subr.bf16.mxu0 0
    %244 = vmatpush1.bf16.msra.mxu0 %v228
    %245 = vmatprep.subr.bf16.mxu0 0
    %246 = vmatpush1.bf16.msra.mxu0 %v227
    %247 = vmatprep.subr.bf16.mxu0 0
    %248 = vmatpush1.bf16.msra.mxu0 %v226
    %249 = vmatprep.subr.bf16.mxu0 0
    %250 = vmatpush1.bf16.msra.mxu0 %v225
    %251 = vmatprep.subr.bf16.mxu0 0
    %252 = vmatpush1.bf16.msra.mxu0 %v224
    %253 = vmatprep.subr.bf16.mxu0 0
    %254 = vmatpush1.bf16.msra.mxu0 %v223
    %255 = vmatprep.subr.bf16.mxu0 0
    %256 = vmatpush2.bf16.msra.mxu0 0
    %257 = vmatprep.subr.bf16.mxu0 0
    %258 = vmatpush2.bf16.msra.mxu0 0
    %259 = vmatprep.subr.bf16.mxu0 0
    %260 = vmatpush2.bf16.msra.mxu0 0
    %261 = vmatprep.subr.bf16.mxu0 0
    %262 = vmatpush2.bf16.msra.mxu0 0
    %263 = vmatprep.subr.bf16.mxu0 0
    %264 = vmatpush2.bf16.msra.mxu0 0
    %265 = vmatprep.subr.bf16.mxu0 0
    %266 = vmatpush2.bf16.msra.mxu0 0
    %267 = vmatprep.subr.bf16.mxu0 0
    %268 = vmatpush2.bf16.msra.mxu0 0
    %269 = vmatprep.subr.bf16.mxu0 0
    %270 = vmatpush2.bf16.msra.mxu0 0
    %271 = vmatprep.mubr.bf16.mxu0 0
    %272 = vmatmul.mubr.bf16.gmra.mxu0 %v167
    %v273 = vpop.f32.mrf.mxu0
    %v274 = vadd.f32 %v189, %v273
    %v275 = vpop.f32.mrf.mxu0
    %v276 = vpop.f32.mrf.mxu0
    %v277 = vpop.f32.mrf.mxu0
    %278 = vdwg.mxu0
    %v279 = vmax.f32 %v274, 0.0
    %v280 = vpack.c.bf16 %v279, %v279
    %v281 = vld [vmem:[#allocation8] sm:$0xff]
    %v282 = vld [vmem:[#allocation8 + $0x8] sm:$0xff]
    %v283 = vld [vmem:[#allocation8 + $0x10] sm:$0xff]
    %v284 = vld [vmem:[#allocation8 + $0x18] sm:$0xff]
    %v285 = vld [vmem:[#allocation8 + $0x20] sm:$0xff]
    %v286 = vld [vmem:[#allocation8 + $0x28] sm:$0xff]
    %v287 = vld [vmem:[#allocation8 + $0x30] sm:$0xff]
    %v288 = vld [vmem:[#allocation8 + $0x38] sm:$0xff]
    %v289 = vld [vmem:[#allocation8 + $0x40] sm:$0xff]
    %v290 = vld [vmem:[#allocation8 + $0x48] sm:$0xff]
    %v291 = vld [vmem:[#allocation8 + $0x50] sm:$0xff]
    %v292 = vld [vmem:[#allocation8 + $0x58] sm:$0xff]
    %v293 = vld [vmem:[#allocation8 + $0x60] sm:$0xff]
    %v294 = vld [vmem:[#allocation8 + $0x68] sm:$0xff]
    %v295 = vld [vmem:[#allocation8 + $0x70] sm:$0xff]
    %v296 = vld [vmem:[#allocation8 + $0x78] sm:$0xff]
    %v297 = vld [vmem:[%s6] sm:$0x3]
    %v299 = vlaneseq
    %v300 = vshrl.u32 %v299, 7
    %v301 = vsub.s32 0, %v300
    %v302 = vrot.slane %v297, %v301
    %v303 = vlaneseq
    %v304 = vshrl.u32 %v303, 7
    %v305 = vsub.s32 1, %v304
    %v306 = vrot.slane %v297, %v305
    %v325 = vunpack.c.l.b16 %v281
    %v326 = vunpack.c.h.b16 %v281
    %v327 = vunpack.c.l.b16 %v282
    %v328 = vunpack.c.h.b16 %v282
    %v329 = vunpack.c.l.b16 %v283
    %v330 = vunpack.c.h.b16 %v283
    %v331 = vunpack.c.l.b16 %v284
    %v332 = vunpack.c.h.b16 %v284
    %v333 = vunpack.c.l.b16 %v285
    %v334 = vunpack.c.h.b16 %v285
    %v335 = vunpack.c.l.b16 %v286
    %v336 = vunpack.c.h.b16 %v286
    %v337 = vunpack.c.l.b16 %v287
    %v338 = vunpack.c.h.b16 %v287
    %v339 = vunpack.c.l.b16 %v288
    %v340 = vunpack.c.h.b16 %v288
    %v341 = vunpack.c.l.b16 %v289
    %v342 = vunpack.c.h.b16 %v289
    %v343 = vunpack.c.l.b16 %v290
    %v344 = vunpack.c.h.b16 %v290
    %v345 = vunpack.c.l.b16 %v291
    %v346 = vunpack.c.h.b16 %v291
    %v347 = vunpack.c.l.b16 %v292
    %v348 = vunpack.c.h.b16 %v292
    %v349 = vunpack.c.l.b16 %v293
    %v350 = vunpack.c.h.b16 %v293
    %v351 = vunpack.c.l.b16 %v294
    %v352 = vunpack.c.h.b16 %v294
    %v353 = vunpack.c.l.b16 %v295
    %v354 = vunpack.c.h.b16 %v295
    %v355 = vunpack.c.l.b16 %v296
    %v356 = vunpack.c.h.b16 %v296
    %v357 = vpack.c.b16 %v327, %v325
    %v358 = vpack.c.b16 %v328, %v326
    %v359 = vpack.c.b16 %v331, %v329
    %v360 = vpack.c.b16 %v332, %v330
    %v361 = vpack.c.b16 %v335, %v333
    %v362 = vpack.c.b16 %v336, %v334
    %v363 = vpack.c.b16 %v339, %v337
    %v364 = vpack.c.b16 %v340, %v338
    %v365 = vpack.c.b16 %v343, %v341
    %v366 = vpack.c.b16 %v344, %v342
    %v367 = vpack.c.b16 %v347, %v345
    %v368 = vpack.c.b16 %v348, %v346
    %v369 = vpack.c.b16 %v351, %v349
    %v370 = vpack.c.b16 %v352, %v350
    %v371 = vpack.c.b16 %v355, %v353
    %v372 = vpack.c.b16 %v356, %v354
    %389 = vmatprep.subr.bf16.mxu0 %v372
    %390 = vmatpush1.bf16.msra.mxu0 %v371
    %391 = vmatprep.subr.bf16.mxu0 %v370
    %392 = vmatpush1.bf16.msra.mxu0 %v369
    %393 = vmatprep.subr.bf16.mxu0 %v368
    %394 = vmatpush1.bf16.msra.mxu0 %v367
    %395 = vmatprep.subr.bf16.mxu0 %v366
    %396 = vmatpush1.bf16.msra.mxu0 %v365
    %397 = vmatprep.subr.bf16.mxu0 %v364
    %398 = vmatpush1.bf16.msra.mxu0 %v363
    %399 = vmatprep.subr.bf16.mxu0 %v362
    %400 = vmatpush1.bf16.msra.mxu0 %v361
    %401 = vmatprep.subr.bf16.mxu0 %v360
    %402 = vmatpush1.bf16.msra.mxu0 %v359
    %403 = vmatprep.subr.bf16.mxu0 %v358
    %404 = vmatpush1.bf16.msra.mxu0 %v357
    %405 = vmatprep.subr.bf16.mxu0 0
    %406 = vmatpush2.bf16.msra.mxu0 0
    %407 = vmatprep.subr.bf16.mxu0 0
    %408 = vmatpush2.bf16.msra.mxu0 0
    %409 = vmatprep.subr.bf16.mxu0 0
    %410 = vmatpush2.bf16.msra.mxu0 0
    %411 = vmatprep.subr.bf16.mxu0 0
    %412 = vmatpush2.bf16.msra.mxu0 0
    %413 = vmatprep.subr.bf16.mxu0 0
    %414 = vmatpush2.bf16.msra.mxu0 0
    %415 = vmatprep.subr.bf16.mxu0 0
    %416 = vmatpush2.bf16.msra.mxu0 0
    %417 = vmatprep.subr.bf16.mxu0 0
    %418 = vmatpush2.bf16.msra.mxu0 0
    %419 = vmatprep.subr.bf16.mxu0 0
    %420 = vmatpush2.bf16.msra.mxu0 0
    %421 = vmatprep.mubr.bf16.mxu0 0
    %422 = vmatmul.mubr.bf16.gmra.mxu0 %v280
    %v423 = vpop.f32.mrf.mxu0
    %v424 = vadd.f32 %v302, %v423
    %v425 = vpop.f32.mrf.mxu0
    %v426 = vadd.f32 %v306, %v425
    %v427 = vpop.f32.mrf.mxu0
    %v428 = vpop.f32.mrf.mxu0
    %429 = vdwg.mxu0
    %v430 = vxor.u32 %v424, 2147483648
    %v431 = vxor.u32 %v426, 2147483648
    %v432 = vmul.f32 %v430, 1.442695
    %v433 = vpow.pop %v432
    %v434 = vmul.f32 %v431, 1.442695
    %v435 = vpow.pop %v434
    %v436 = vadd.f32 %v433, 1.0
    %v437 = vadd.f32 %v435, 1.0
    %v438 = vrcp.pop %v436
    %v439 = vmul.f32 1.0, %v438
    %v440 = vrcp.pop %v437
    %v441 = vmul.f32 1.0, %v440
    %442 = vst [vmem:[#allocation10] sm:$0xff] %v439
    %443 = vst [vmem:[#allocation10 + $0x8] sm:$0xff] %v441
    // Predicated region
    $region46: #{tpu_custom_call.1} parent=1 // pred_check
      _
    $region47: #{tpu_custom_call.1} parent=1 // pred_check_branch
      %445 = sbr.rel (0) target = $region49
    $region48: #{tpu_custom_call.1} parent=1 // pred_region
      %s447 = ssub.s32 256, 256
      %448 = vsyncadd [#allocation4], %s447
      %s450 = sshll.u32 [#allocation10], 4
      %s451 = int_to_ptr.vmem [resolvable:$true] %s450
      %453 = dma.vmem_to_hbm [thread:$0]  %s451, 256, %s7, [#allocation4]
    $region49: #{tpu_custom_call.1} parent=1 // pred_fallthru
      _
    // Predicated region
    $region50: #{tpu_custom_call.1} parent=1 // pred_check
      _
    $region51: #{tpu_custom_call.1} parent=1 // pred_check_branch
      %455 = sbr.rel (0) target = $region53
    $region52: #{tpu_custom_call.1} parent=1 // pred_region
      %456 = dma.done [#allocation4], 256
    $region53: #{tpu_custom_call.1} parent=1 // pred_fallthru
      _
    %457 = vsyncpa [#allocation3], 1
    %458 = vsyncpa [#allocation6], 1
    %459 = vsyncpa [#allocation9], 1
    %460 = vsyncpa [#allocation4], 1

</llo_original>
